<compile_context>
chip_gen: v5e
topology: v5e:2x2
jax: 0.10.0
libtpu: 0.0.40
codegen_flags: <defaults>
</compile_context>

<pallas_src>
import jax
import jax.numpy as jnp
from jax.experimental import pallas as pl
from jax.experimental.pallas import tpu as pltpu

N_EMBED = 384      # nEmbed in the PyTorch module
HEAD_SIZE = 32     # headSize constructor arg (chosen small for the demo)


def head_kernel(x_ref, wqkv_ref, o_ref):
    Bb, T, C = x_ref.shape          # batch-block, seq, embed (static)
    H = o_ref.shape[-1]             # head size (static)

    # Flatten the batch-block rows so the projection matmul has M = Bb*T rows
    # (fills MXU sublanes instead of 8-row matmuls per batch element).
    x2 = x_ref[...].reshape(Bb * T, C)            # (Bb*T, C) bf16
    wqkv = wqkv_ref[...]                          # (C, 3H)   bf16

    # Fused K/Q/V projection: one MXU matmul, f32 accumulation.
    qkv = jnp.dot(x2, wqkv, preferred_element_type=jnp.float32)   # (Bb*T, 3H) f32

    # Scale folded into q (T*H multiplies instead of T*T on the score matrix).
    scale = C ** (-0.5)
    k = qkv[:, 0 * H:1 * H].reshape(Bb, T, H)
    q = (qkv[:, 1 * H:2 * H] * scale).reshape(Bb, T, H)
    v = qkv[:, 2 * H:3 * H].reshape(Bb, T, H)

    # Attention scores: contract on the head dim directly (no k transpose),
    # bf16 MXU inputs, f32 accumulation.
    s = jnp.einsum('bqh,bkh->bqk',
                   q.astype(jnp.bfloat16), k.astype(jnp.bfloat16),
                   preferred_element_type=jnp.float32)            # (Bb, T, T)

    # Causal mask: masked_fill(tril == 0, -inf).
    row = jax.lax.broadcasted_iota(jnp.int32, (Bb, T, T), 1)
    col = jax.lax.broadcasted_iota(jnp.int32, (Bb, T, T), 2)
    s = jnp.where(col <= row, s, -jnp.inf)

    # Numerically stable softmax; the divide goes to the EUP slot via an
    # approximate reciprocal and becomes a broadcast multiply on the VPU.
    s = s - jnp.max(s, axis=-1, keepdims=True)
    p = jnp.exp(s)
    p = p * pl.reciprocal(jnp.sum(p, axis=-1, keepdims=True), approx=True)

    # TODO(synk): nn.Dropout(0.2) is identity in eval mode; training-mode dropout
    # would use pltpu.prng_seed / pltpu.prng_random_bits on p.

    out = jnp.einsum('bqk,bkh->bqh',
                     p.astype(jnp.bfloat16), v.astype(jnp.bfloat16),
                     preferred_element_type=jnp.float32)          # (Bb, T, H)
    o_ref[...] = out.astype(o_ref.dtype)


def _pick_batch_block(B, T, target_rows=128):
    """Smallest divisor of B giving >= target_rows rows per grid step, else B."""
    for d in range(1, B + 1):
        if B % d == 0 and d * T >= target_rows:
            return d
    return B


def head_forward(x, wk, wq, wv):
    """x: (B, T, C) f32;  wk/wq/wv: (C, H) f32.  Returns (B, T, H) f32."""
    B, T, C = x.shape
    H = wk.shape[1]

    # Fuse the three projection weights into one (C, 3H) matrix and feed the MXU bf16.
    w_qkv = jnp.concatenate([wk, wq, wv], axis=1).astype(jnp.bfloat16)
    x_bf16 = x.astype(jnp.bfloat16)

    bb = _pick_batch_block(B, T)
    grid = (B // bb,)

    return pl.pallas_call(
        head_kernel,
        out_shape=jax.ShapeDtypeStruct((B, T, H), jnp.float32),
        grid_spec=pltpu.PrefetchScalarGridSpec(
            num_scalar_prefetch=0,
            grid=grid,
            in_specs=[
                pl.BlockSpec((bb, T, C), lambda b: (b, 0, 0)),       # x batch-block
                pl.BlockSpec((C, 3 * H), lambda b: (0, 0)),          # fused Wqkv (resident)
            ],
            out_specs=pl.BlockSpec((bb, T, H), lambda b: (b, 0, 0)),
        ),
        compiler_params=pltpu.CompilerParams(
            dimension_semantics=("parallel",)),
    )(x_bf16, w_qkv)


def reference_forward(x, wk, wq, wv):
    """Pure-JAX f32 reference matching the PyTorch forward (eval mode)."""
    B, T, C = x.shape
    k = x @ wk
    q = x @ wq
    v = x @ wv
    wei = (q @ jnp.swapaxes(k, -2, -1)) * (C ** -0.5)
    mask = jnp.tril(jnp.ones((T, T), dtype=bool))
    wei = jnp.where(mask, wei, -jnp.inf)
    wei = jax.nn.softmax(wei, axis=-1)
    return wei @ v


if __name__ == "__main__":
    B, T, C, H = 2, 8, N_EMBED, HEAD_SIZE

    key = jax.random.PRNGKey(0)
    kx, kk, kq, kv = jax.random.split(key, 4)
    x = jax.random.normal(kx, (B, T, C), dtype=jnp.float32)
    # Deterministic "Linear(nEmbed, headSize, bias=False)" weights, stored as (C, H).
    wk = jax.random.normal(kk, (C, H), dtype=jnp.float32) * 0.02
    wq = jax.random.normal(kq, (C, H), dtype=jnp.float32) * 0.02
    wv = jax.random.normal(kv, (C, H), dtype=jnp.float32) * 0.02

    out = head_forward(x, wk, wq, wv)
    out = jax.block_until_ready(out)

    ref = reference_forward(x, wk, wq, wv)
    assert out.shape == (B, T, H)
    # Kernel runs the matmuls in bf16 (f32 accumulation) and uses an approximate
    # EUP reciprocal for the softmax denominator, so compare at bf16-level tolerance.
    assert jnp.allclose(out, ref, atol=2e-2, rtol=2e-2), "mismatch vs reference"

    print("KERNEL_OK")
</pallas_src>

<mosaic_0001>
module attributes {stable_mosaic.version = 11 : i64} {
  func.func @head_kernel(%arg0: i32, %arg1: memref<2x8x384xbf16, #tpu.memory_space<vmem>>, %arg2: memref<384x96xbf16, #tpu.memory_space<vmem>>, %arg3: memref<2x8x32xf32, #tpu.memory_space<vmem>>) attributes {dimension_semantics = [#tpu.dimension_semantics<parallel>], iteration_bounds = array<i64: 1>, scalar_prefetch = 0 : i64, scratch_operands = 0 : i64, tpu.core_type = #tpu.core_type<tc>, window_params = [{transform_indices = @transform_0, window_bounds = array<i64: 2, 8, 384>}, {pipeline_mode = #tpu.pipeline_mode<synchronous>, transform_indices = @transform_1, window_bounds = array<i64: 384, 96>}, {transform_indices = @transform_2, window_bounds = array<i64: 2, 8, 32>}]} {
    %c0 = arith.constant 0 : index
    %c0_0 = arith.constant 0 : index
    %c0_1 = arith.constant 0 : index
    %0 = vector.load %arg1[%c0, %c0_0, %c0_1] : memref<2x8x384xbf16, #tpu.memory_space<vmem>>, vector<2x8x384xbf16>
    %1 = vector.shape_cast %0 : vector<2x8x384xbf16> to vector<16x384xbf16>
    %c0_2 = arith.constant 0 : index
    %c0_3 = arith.constant 0 : index
    %2 = vector.load %arg2[%c0_2, %c0_3] : memref<384x96xbf16, #tpu.memory_space<vmem>>, vector<384x96xbf16>
    %cst = arith.constant dense<0.000000e+00> : vector<16x96xf32>
    %3 = tpu.matmul %1, %2, %cst {dimension_numbers = #tpu.dot_dimension_numbers<[1], [0], [0], [1], [0, 0, 1, 1], [], []>} : vector<16x384xbf16>, vector<384x96xbf16>, vector<16x96xf32> -> vector<16x96xf32>
    %4 = vector.extract_strided_slice %3 {offsets = [0, 0], sizes = [16, 32], strides = [1, 1]} : vector<16x96xf32> to vector<16x32xf32>
    %5 = vector.shape_cast %4 : vector<16x32xf32> to vector<2x8x32xf32>
    %6 = vector.extract_strided_slice %3 {offsets = [0, 32], sizes = [16, 32], strides = [1, 1]} : vector<16x96xf32> to vector<16x32xf32>
    %cst_4 = arith.constant 0.0510310382 : f32
    %7 = vector.broadcast %cst_4 : f32 to vector<16x32xf32>
    %8 = arith.mulf %6, %7 : vector<16x32xf32>
    %9 = vector.shape_cast %8 : vector<16x32xf32> to vector<2x8x32xf32>
    %10 = vector.extract_strided_slice %3 {offsets = [0, 64], sizes = [16, 32], strides = [1, 1]} : vector<16x96xf32> to vector<16x32xf32>
    %11 = vector.shape_cast %10 : vector<16x32xf32> to vector<2x8x32xf32>
    %12 = arith.truncf %9 : vector<2x8x32xf32> to vector<2x8x32xbf16>
    %13 = arith.truncf %5 : vector<2x8x32xf32> to vector<2x8x32xbf16>
    "tpu.trace_start"() <{level = 10 : i32, message = "bqh,bkh->bqk"}> : () -> ()
    %cst_5 = arith.constant dense<0.000000e+00> : vector<2x8x8xf32>
    %14 = tpu.matmul %12, %13, %cst_5 {dimension_numbers = #tpu.dot_dimension_numbers<[2], [2], [1], [1], [0, 0, 0, 1, 1, 1], [0], [0]>} : vector<2x8x32xbf16>, vector<2x8x32xbf16>, vector<2x8x8xf32> -> vector<2x8x8xf32>
    "tpu.trace_stop"() : () -> ()
    %15 = tpu.iota {dimensions = array<i32: 1>} : vector<2x8x8xi32>
    %16 = tpu.iota {dimensions = array<i32: 2>} : vector<2x8x8xi32>
    %17 = arith.cmpi sle, %16, %15 : vector<2x8x8xi32>
    %cst_6 = arith.constant 0xFF800000 : f32
    %18 = vector.broadcast %cst_6 : f32 to vector<2x8x8xf32>
    %19 = arith.select %17, %14, %18 : vector<2x8x8xi1>, vector<2x8x8xf32>
    %cst_7 = arith.constant dense<0xFF800000> : vector<2x8xf32>
    %20 = vector.multi_reduction <maximumf>, %19, %cst_7 [2] : vector<2x8x8xf32> to vector<2x8xf32>
    %21 = vector.shape_cast %20 : vector<2x8xf32> to vector<2x8x1xf32>
    %22 = vector.broadcast %21 : vector<2x8x1xf32> to vector<2x8x8xf32>
    %23 = arith.subf %19, %22 : vector<2x8x8xf32>
    %24 = math.exp %23 : vector<2x8x8xf32>
    %cst_8 = arith.constant dense<0.000000e+00> : vector<2x8xf32>
    %25 = vector.multi_reduction <add>, %24, %cst_8 [2] : vector<2x8x8xf32> to vector<2x8xf32>
    %26 = vector.shape_cast %25 : vector<2x8xf32> to vector<2x8x1xf32>
    %27 = tpu.reciprocal %26 {approx = true} : vector<2x8x1xf32> -> vector<2x8x1xf32>
    %28 = vector.broadcast %27 : vector<2x8x1xf32> to vector<2x8x8xf32>
    %29 = arith.mulf %24, %28 : vector<2x8x8xf32>
    %30 = arith.truncf %29 : vector<2x8x8xf32> to vector<2x8x8xbf16>
    %31 = arith.truncf %11 : vector<2x8x32xf32> to vector<2x8x32xbf16>
    "tpu.trace_start"() <{level = 10 : i32, message = "bqk,bkh->bqh"}> : () -> ()
    %cst_9 = arith.constant dense<0.000000e+00> : vector<2x8x32xf32>
    %32 = tpu.matmul %30, %31, %cst_9 {dimension_numbers = #tpu.dot_dimension_numbers<[2], [1], [1], [2], [0, 0, 0, 1, 1, 2], [0], [0]>} : vector<2x8x8xbf16>, vector<2x8x32xbf16>, vector<2x8x32xf32> -> vector<2x8x32xf32>
    "tpu.trace_stop"() : () -> ()
    %c0_10 = arith.constant 0 : index
    %c0_11 = arith.constant 0 : index
    %c0_12 = arith.constant 0 : index
    %33 = vector.load %arg3[%c0_10, %c0_11, %c0_12] : memref<2x8x32xf32, #tpu.memory_space<vmem>>, vector<2x8x32xf32>
    tpu.vector_store %arg3[%c0_10, %c0_11, %c0_12], %32 {strides = array<i32>} : memref<2x8x32xf32, #tpu.memory_space<vmem>>, vector<2x8x32xf32>,
    return
  }
  func.func @transform_0(%arg0: i32) -> (i32, i32, i32) {
    %c0_i32 = arith.constant 0 : i32
    %c0_i32_0 = arith.constant 0 : i32
    %c0_i32_1 = arith.constant 0 : i32
    return %arg0, %c0_i32, %c0_i32_0 : i32, i32, i32
  }
  func.func @transform_1(%arg0: i32) -> (i32, i32) {
    %c0_i32 = arith.constant 0 : i32
    %c0_i32_0 = arith.constant 0 : i32
    %c0_i32_1 = arith.constant 0 : i32
    return %c0_i32, %c0_i32_0 : i32, i32
  }
  func.func @transform_2(%arg0: i32) -> (i32, i32, i32) {
    %c0_i32 = arith.constant 0 : i32
    %c0_i32_0 = arith.constant 0 : i32
    %c0_i32_1 = arith.constant 0 : i32
    return %arg0, %c0_i32, %c0_i32_0 : i32, i32, i32
  }
}

</mosaic_0001>

<llo_original>
// kernel: tpu_custom_call.1
$region0: #{tpu_custom_call.1}
  #allocation0 [shape = 'u32[]', space=smem, size = 0x4, offset = 0x4, fixed_abs, tag = 'smem constant byte address 0x4 - core index']
  #allocation1 [shape = 'u32[72,128]{1,0:T(1,128)}', space=vmem, size = 0x9000, scoped, tag = 'internal scratch']
  %s0 = inlined_call_operand.vmem [shape: bf16[2,8,384], index: 0, kind: input, shape index: {}]
  %s1 = inlined_call_operand.vmem [shape: bf16[384,96], index: 1, kind: input, shape index: {}]
  %s2 = inlined_call_operand.hbm [shape: f32[2,8,32], index: 2, kind: output, shape index: {}]
  %s3 = sld [smem:[#allocation0]]
  $region18: #{tpu_custom_call.1} parent=0
    _
  %s5 = ssub.s32 1, %s3
  %s6 = scalar_select 0, %s5, %s3
  $region1: #{tpu_custom_call.1} parent=0
    #allocation2 [shape = 'u8[8192]{0}', space=vmem, size = 0x2000, scoped, tag = 'output window, operand 0, single buffered']
    #allocation3 [shape = 's32[1]{0}', space=sflag, size = 0x4, scoped, tag = 'scoped memory for tpu_custom_call.1']
    %7 = vsyncpa [#allocation3], 0
    // Predicated region
    $region2: #{tpu_custom_call.1} parent=1 // pred_check
      _
    $region3: #{tpu_custom_call.1} parent=1 // pred_check_branch
      %9 = sbr.rel (0) target = $region5
    $region4: #{tpu_custom_call.1} parent=1 // pred_region
      _
    $region5: #{tpu_custom_call.1} parent=1 // pred_fallthru
      _
    // Predicated region
    $region6: #{tpu_custom_call.1} parent=1 // pred_check
      _
    $region7: #{tpu_custom_call.1} parent=1 // pred_check_branch
      %11 = sbr.rel (0) target = $region9
    $region8: #{tpu_custom_call.1} parent=1 // pred_region
      _
    $region9: #{tpu_custom_call.1} parent=1 // pred_fallthru
      _
    %v13 = vld [vmem:[%s0] sm:$0xff]
    %v14 = vld [vmem:[%s0 + $0x8] sm:$0xf]
    %v15 = vld [vmem:[%s0 + $0xc] sm:$0xff]
    %v16 = vld [vmem:[%s0 + $0x14] sm:$0xf]
    %v17 = vld [vmem:[%s1] sm:$0xf]
    %v18 = vld [vmem:[%s1 + $0x4] sm:$0xf]
    %v19 = vld [vmem:[%s1 + $0x8] sm:$0xf]
    %v20 = vld [vmem:[%s1 + $0xc] sm:$0xf]
    %v21 = vld [vmem:[%s1 + $0x10] sm:$0xf]
    %v22 = vld [vmem:[%s1 + $0x14] sm:$0xf]
    %v23 = vld [vmem:[%s1 + $0x18] sm:$0xf]
    %v24 = vld [vmem:[%s1 + $0x1c] sm:$0xf]
    %v25 = vld [vmem:[%s1 + $0x20] sm:$0xf]
    %v26 = vld [vmem:[%s1 + $0x24] sm:$0xf]
    %v27 = vld [vmem:[%s1 + $0x28] sm:$0xf]
    %v28 = vld [vmem:[%s1 + $0x2c] sm:$0xf]
    %v29 = vld [vmem:[%s1 + $0x30] sm:$0xf]
    %v30 = vld [vmem:[%s1 + $0x34] sm:$0xf]
    %v31 = vld [vmem:[%s1 + $0x38] sm:$0xf]
    %v32 = vld [vmem:[%s1 + $0x3c] sm:$0xf]
    %v33 = vld [vmem:[%s1 + $0x40] sm:$0xf]
    %v34 = vld [vmem:[%s1 + $0x44] sm:$0xf]
    %v35 = vld [vmem:[%s1 + $0x48] sm:$0xf]
    %v36 = vld [vmem:[%s1 + $0x4c] sm:$0xf]
    %v37 = vld [vmem:[%s1 + $0x50] sm:$0xf]
    %v38 = vld [vmem:[%s1 + $0x54] sm:$0xf]
    %v39 = vld [vmem:[%s1 + $0x58] sm:$0xf]
    %v40 = vld [vmem:[%s1 + $0x5c] sm:$0xf]
    %v41 = vld [vmem:[%s1 + $0x60] sm:$0xf]
    %v42 = vld [vmem:[%s1 + $0x64] sm:$0xf]
    %v43 = vld [vmem:[%s1 + $0x68] sm:$0xf]
    %v44 = vld [vmem:[%s1 + $0x6c] sm:$0xf]
    %v45 = vld [vmem:[%s1 + $0x70] sm:$0xf]
    %v46 = vld [vmem:[%s1 + $0x74] sm:$0xf]
    %v47 = vld [vmem:[%s1 + $0x78] sm:$0xf]
    %v48 = vld [vmem:[%s1 + $0x7c] sm:$0xf]
    %v49 = vld [vmem:[%s1 + $0x80] sm:$0xf]
    %v50 = vld [vmem:[%s1 + $0x84] sm:$0xf]
    %v51 = vld [vmem:[%s1 + $0x88] sm:$0xf]
    %v52 = vld [vmem:[%s1 + $0x8c] sm:$0xf]
    %v53 = vld [vmem:[%s1 + $0x90] sm:$0xf]
    %v54 = vld [vmem:[%s1 + $0x94] sm:$0xf]
    %v55 = vld [vmem:[%s1 + $0x98] sm:$0xf]
    %v56 = vld [vmem:[%s1 + $0x9c] sm:$0xf]
    %v57 = vld [vmem:[%s1 + $0xa0] sm:$0xf]
    %v58 = vld [vmem:[%s1 + $0xa4] sm:$0xf]
    %v59 = vld [vmem:[%s1 + $0xa8] sm:$0xf]
    %v60 = vld [vmem:[%s1 + $0xac] sm:$0xf]
    %v61 = vld [vmem:[%s1 + $0xb0] sm:$0xf]
    %v62 = vld [vmem:[%s1 + $0xb4] sm:$0xf]
    %v63 = vld [vmem:[%s1 + $0xb8] sm:$0xf]
    %v64 = vld [vmem:[%s1 + $0xbc] sm:$0xf]
    %v69 = vunpack.c.l.b16 %v13
    %v70 = vunpack.c.h.b16 %v13
    %v71 = vunpack.c.l.b16 %v14
    %v72 = vunpack.c.l.b16 %v15
    %v73 = vunpack.c.h.b16 %v15
    %v74 = vunpack.c.l.b16 %v16
    %v75 = vpack.c.b16 %v72, %v69
    %v76 = vpack.c.b16 %v73, %v70
    %v77 = vpack.c.b16 %v74, %v71
    %v129 = vunpack.c.l.b16 %v17
    %v130 = vunpack.c.l.b16 %v18
    %v131 = vunpack.c.l.b16 %v19
    %v132 = vunpack.c.l.b16 %v20
    %v133 = vunpack.c.l.b16 %v21
    %v134 = vunpack.c.l.b16 %v22
    %v135 = vunpack.c.l.b16 %v23
    %v136 = vunpack.c.l.b16 %v24
    %v137 = vunpack.c.l.b16 %v25
    %v138 = vunpack.c.l.b16 %v26
    %v139 = vunpack.c.l.b16 %v27
    %v140 = vunpack.c.l.b16 %v28
    %v141 = vunpack.c.l.b16 %v29
    %v142 = vunpack.c.l.b16 %v30
    %v143 = vunpack.c.l.b16 %v31
    %v144 = vunpack.c.l.b16 %v32
    %v145 = vunpack.c.l.b16 %v33
    %v146 = vunpack.c.l.b16 %v34
    %v147 = vunpack.c.l.b16 %v35
    %v148 = vunpack.c.l.b16 %v36
    %v149 = vunpack.c.l.b16 %v37
    %v150 = vunpack.c.l.b16 %v38
    %v151 = vunpack.c.l.b16 %v39
    %v152 = vunpack.c.l.b16 %v40
    %v153 = vunpack.c.l.b16 %v41
    %v154 = vunpack.c.l.b16 %v42
    %v155 = vunpack.c.l.b16 %v43
    %v156 = vunpack.c.l.b16 %v44
    %v157 = vunpack.c.l.b16 %v45
    %v158 = vunpack.c.l.b16 %v46
    %v159 = vunpack.c.l.b16 %v47
    %v160 = vunpack.c.l.b16 %v48
    %v161 = vunpack.c.l.b16 %v49
    %v162 = vunpack.c.l.b16 %v50
    %v163 = vunpack.c.l.b16 %v51
    %v164 = vunpack.c.l.b16 %v52
    %v165 = vunpack.c.l.b16 %v53
    %v166 = vunpack.c.l.b16 %v54
    %v167 = vunpack.c.l.b16 %v55
    %v168 = vunpack.c.l.b16 %v56
    %v169 = vunpack.c.l.b16 %v57
    %v170 = vunpack.c.l.b16 %v58
    %v171 = vunpack.c.l.b16 %v59
    %v172 = vunpack.c.l.b16 %v60
    %v173 = vunpack.c.l.b16 %v61
    %v174 = vunpack.c.l.b16 %v62
    %v175 = vunpack.c.l.b16 %v63
    %v176 = vunpack.c.l.b16 %v64
    %v177 = vpack.c.b16 %v130, %v129
    %v178 = vpack.c.b16 %v132, %v131
    %v179 = vpack.c.b16 %v134, %v133
    %v180 = vpack.c.b16 %v136, %v135
    %v181 = vpack.c.b16 %v138, %v137
    %v182 = vpack.c.b16 %v140, %v139
    %v183 = vpack.c.b16 %v142, %v141
    %v184 = vpack.c.b16 %v144, %v143
    %v185 = vpack.c.b16 %v146, %v145
    %v186 = vpack.c.b16 %v148, %v147
    %v187 = vpack.c.b16 %v150, %v149
    %v188 = vpack.c.b16 %v152, %v151
    %v189 = vpack.c.b16 %v154, %v153
    %v190 = vpack.c.b16 %v156, %v155
    %v191 = vpack.c.b16 %v158, %v157
    %v192 = vpack.c.b16 %v160, %v159
    %v193 = vpack.c.b16 %v162, %v161
    %v194 = vpack.c.b16 %v164, %v163
    %v195 = vpack.c.b16 %v166, %v165
    %v196 = vpack.c.b16 %v168, %v167
    %v197 = vpack.c.b16 %v170, %v169
    %v198 = vpack.c.b16 %v172, %v171
    %v199 = vpack.c.b16 %v174, %v173
    %v200 = vpack.c.b16 %v176, %v175
    %225 = vmatpush.bf16.msra.mxu0 %v184
    %226 = vmatpush.bf16.msra.mxu0 %v183
    %227 = vmatpush.bf16.msra.mxu0 %v182
    %228 = vmatpush.bf16.msra.mxu0 %v181
    %229 = vmatpush.bf16.msra.mxu0 %v180
    %230 = vmatpush.bf16.msra.mxu0 %v179
    %231 = vmatpush.bf16.msra.mxu0 %v178
    %232 = vmatpush.bf16.msra.mxu0 %v177
    %233 = vmatmul.bf16.gmra.mxu0 %v75
    %v234 = vpop.f32.mrf.mxu0
    %v235 = vadd.f32 0.0, %v234
    %v236 = vpop.f32.mrf.mxu0
    %v237 = vadd.f32 0.0, %v236
    %238 = vdwg.mxu0
    %239 = vmatpush.bf16.msra.mxu0 %v192
    %240 = vmatpush.bf16.msra.mxu0 %v191
    %241 = vmatpush.bf16.msra.mxu0 %v190
    %242 = vmatpush.bf16.msra.mxu0 %v189
    %243 = vmatpush.bf16.msra.mxu0 %v188
    %244 = vmatpush.bf16.msra.mxu0 %v187
    %245 = vmatpush.bf16.msra.mxu0 %v186
    %246 = vmatpush.bf16.msra.mxu0 %v185
    %247 = vmatmul.bf16.gmra.mxu0 %v76
    %v248 = vpop.f32.mrf.mxu0
    %v249 = vadd.f32 %v235, %v248
    %v250 = vpop.f32.mrf.mxu0
    %v251 = vadd.f32 %v237, %v250
    %252 = vdwg.mxu0
    %253 = vmatpush.bf16.msra.mxu0 %v200
    %254 = vmatpush.bf16.msra.mxu0 %v199
    %255 = vmatpush.bf16.msra.mxu0 %v198
    %256 = vmatpush.bf16.msra.mxu0 %v197
    %257 = vmatpush.bf16.msra.mxu0 %v196
    %258 = vmatpush.bf16.msra.mxu0 %v195
    %259 = vmatpush.bf16.msra.mxu0 %v194
    %260 = vmatpush.bf16.msra.mxu0 %v193
    %261 = vmatmul.bf16.gmra.mxu0 %v77
    %v262 = vpop.f32.mrf.mxu0
    %v263 = vadd.f32 %v249, %v262
    %v264 = vpop.f32.mrf.mxu0
    %v265 = vadd.f32 %v251, %v264
    %266 = vdwg.mxu0
    %v267 = vmul.f32 %v263, 0.05103104
    %v268 = vmul.f32 %v265, 0.05103104
    %v269 = vpack.c.bf16 %v267, %v267
    %v270 = vpack.c.bf16 %v268, %v268
    %v271 = vpack.c.bf16 %v263, %v263
    %v272 = vpack.c.bf16 %v265, %v265
    %v274 = vunpack.c.l.b16 %v269
    %v275 = vpack.c.b16 %v274, %v274
    %276 = vrot.lane.b32.xlu0 %v275, 96
    %v277 = vpop.permute.xlu0 %276
    %vm278 = vcmask 261120
    %v280 = vsel %vm278, %v277, 0
    %v283 = vsel %vm278, %v271, 0
    %285 = vmatpush.bf16.xpose.msra.mxu0 0
    %286 = vmatpush.bf16.xpose.msra.mxu0 0
    %287 = vmatpush.bf16.xpose.msra.mxu0 0
    %288 = vmatpush.bf16.xpose.msra.mxu0 0
    %289 = vmatpush.bf16.xpose.msra.mxu0 0
    %290 = vmatpush.bf16.xpose.msra.mxu0 0
    %291 = vmatpush.bf16.xpose.msra.mxu0 0
    %292 = vmatpush.bf16.xpose.msra.mxu0 %v283
    %293 = vmatmul.bf16.gmra.mxu0 %v280
    %v294 = vpop.f32.mrf.mxu0
    %v295 = vadd.f32 0.0, %v294
    %v296 = vpop.f32.mrf.mxu0
    %297 = vdwg.mxu0
    %v299 = vunpack.c.l.b16 %v270
    %v300 = vpack.c.b16 %v299, %v299
    %301 = vrot.lane.b32.xlu0 %v300, 96
    %v302 = vpop.permute.xlu0 %301
    %v304 = vsel %vm278, %v302, 0
    %v307 = vsel %vm278, %v272, 0
    %309 = vmatpush.bf16.xpose.msra.mxu0 0
    %310 = vmatpush.bf16.xpose.msra.mxu0 0
    %311 = vmatpush.bf16.xpose.msra.mxu0 0
    %312 = vmatpush.bf16.xpose.msra.mxu0 0
    %313 = vmatpush.bf16.xpose.msra.mxu0 0
    %314 = vmatpush.bf16.xpose.msra.mxu0 0
    %315 = vmatpush.bf16.xpose.msra.mxu0 0
    %316 = vmatpush.bf16.xpose.msra.mxu0 %v307
    %317 = vmatmul.bf16.gmra.mxu0 %v304
    %v318 = vpop.f32.mrf.mxu0
    %v319 = vadd.f32 0.0, %v318
    %v320 = vpop.f32.mrf.mxu0
    %321 = vdwg.mxu0
    %v322 = vlaneseq
    %v323 = vshrl.u32 %v322, 7
    %v324 = vlaneseq
    %v325 = vand.u32 %v324, 127
    %vm326 = vcmp.le.s32.totalorder %v325, %v323
    %v327 = vsel %vm326, %v295, -inf
    %v328 = vsel %vm326, %v319, -inf
    %vm329 = vcmask 64512
    %v330 = vsel %vm329, %v327, -inf
    %331 = vmax.xlane.f32.xlu0 %v330
    %v332 = vpop.xlane.xlu0 %331
    %v333 = vsel %vm329, %v328, -inf
    %334 = vmax.xlane.f32.xlu0 %v333
    %v335 = vpop.xlane.xlu0 %334
    %v336 = vsub.f32 %v327, %v332
    %v337 = vsub.f32 %v328, %v335
    %v338 = vmul.f32 %v336, 1.442695
    %v339 = vpow.pop %v338
    %v340 = vmul.f32 %v337, 1.442695
    %v341 = vpow.pop %v340
    %v342 = vsel %vm329, %v339, 0.0
    %343 = vadd.xlane.f32.xlu0 %v342
    %v344 = vpop.xlane.xlu0 %343
    %v345 = vsel %vm329, %v341, 0.0
    %346 = vadd.xlane.f32.xlu0 %v345
    %v347 = vpop.xlane.xlu0 %346
    %v348 = vrcp.pop %v344
    %v349 = vrcp.pop %v347
    %v350 = vmul.f32 %v339, %v348
    %v351 = vmul.f32 %v341, %v349
    %v352 = vpack.c.bf16 %v350, %v350
    %v353 = vpack.c.bf16 %v351, %v351
    %v355 = vunpack.c.l.b16 %v271
    %v356 = vpack.c.b16 %v355, %v355
    %357 = vrot.lane.b32.xlu0 %v356, 64
    %v358 = vpop.permute.xlu0 %357
    %v360 = vsel %vm329, %v352, 0
    %vm362 = vcmask 1043456
    %v364 = vsel %vm362, %v358, 0
    %366 = vmatpush.bf16.msra.mxu0 0
    %367 = vmatpush.bf16.msra.mxu0 0
    %368 = vmatpush.bf16.msra.mxu0 0
    %369 = vmatpush.bf16.msra.mxu0 0
    %370 = vmatpush.bf16.msra.mxu0 0
    %371 = vmatpush.bf16.msra.mxu0 0
    %372 = vmatpush.bf16.msra.mxu0 0
    %373 = vmatpush.bf16.msra.mxu0 %v364
    %374 = vmatmul.bf16.gmra.mxu0 %v360
    %v375 = vpop.f32.mrf.mxu0
    %v376 = vadd.f32 0.0, %v375
    %v377 = vpop.f32.mrf.mxu0
    %378 = vdwg.mxu0
    %v380 = vunpack.c.l.b16 %v272
    %v381 = vpack.c.b16 %v380, %v380
    %382 = vrot.lane.b32.xlu0 %v381, 64
    %v383 = vpop.permute.xlu0 %382
    %v385 = vsel %vm329, %v353, 0
    %v388 = vsel %vm362, %v383, 0
    %390 = vmatpush.bf16.msra.mxu0 0
    %391 = vmatpush.bf16.msra.mxu0 0
    %392 = vmatpush.bf16.msra.mxu0 0
    %393 = vmatpush.bf16.msra.mxu0 0
    %394 = vmatpush.bf16.msra.mxu0 0
    %395 = vmatpush.bf16.msra.mxu0 0
    %396 = vmatpush.bf16.msra.mxu0 0
    %397 = vmatpush.bf16.msra.mxu0 %v388
    %398 = vmatmul.bf16.gmra.mxu0 %v385
    %v399 = vpop.f32.mrf.mxu0
    %v400 = vadd.f32 0.0, %v399
    %v401 = vpop.f32.mrf.mxu0
    %402 = vdwg.mxu0
    %403 = vst.msk [vmem:[#allocation2] sm:$0xff] %vm278, %v376
    %404 = vst.msk [vmem:[#allocation2 + $0x8] sm:$0xff] %vm278, %v400
    // Predicated region
    $region10: #{tpu_custom_call.1} parent=1 // pred_check
      _
    $region11: #{tpu_custom_call.1} parent=1 // pred_check_branch
      %406 = sbr.rel (0) target = $region13
    $region12: #{tpu_custom_call.1} parent=1 // pred_region
      %408 = vsyncadd [#allocation3], 0
      %s409 = sshll.u32 [#allocation2], 4
      %s410 = int_to_ptr.vmem [resolvable:$true] %s409
      %s411 = sshll.u32 %s2, 4
      %s412 = int_to_ptr.hbm [resolvable:$true] %s411
      %417 = dma.vmem_to_hbm [thread:$0]  %s410, 256, %s412, [#allocation3], 128, 128, 8
    $region13: #{tpu_custom_call.1} parent=1 // pred_fallthru
      _
    // Predicated region
    $region14: #{tpu_custom_call.1} parent=1 // pred_check
      _
    $region15: #{tpu_custom_call.1} parent=1 // pred_check_branch
      %419 = sbr.rel (0) target = $region17
    $region16: #{tpu_custom_call.1} parent=1 // pred_region
      %421 = dma.done [#allocation3], 256
    $region17: #{tpu_custom_call.1} parent=1 // pred_fallthru
      _
    %422 = vsyncpa [#allocation3], 1

</llo_original>
